<compile_context>
chip_gen: v6e
topology: v6e:2x2x1
jax: 0.10.0
libtpu: 0.0.40
codegen_flags: <defaults>
</compile_context>

<pallas_src>
import jax
import jax.numpy as jnp
from jax.experimental import pallas as pl
from jax.experimental.pallas import tpu as pltpu


# ---------------------------------------------------------------------------
# small helpers
# ---------------------------------------------------------------------------
def _round_up(x, m):
    return (x + m - 1) // m * m


def _round_lane(x):
    # MXU-width-aware lane padding: large channel dims padded to 256 (v6e/v7x
    # MXUs are 256 wide); small dims stay at the 128-lane minimum.
    return _round_up(x, 256) if x >= 256 else _round_up(x, 128)


def _pad2d(a, rows, cols):
    r, c = a.shape
    return jnp.pad(a, ((0, rows - r), (0, cols - c)))


def _vmem_cap_bytes():
    try:
        cap = int(pltpu.get_tpu_info().vmem_capacity_bytes)
        if cap > 0:
            return cap
    except Exception:
        pass
    return 64 << 20  # conservative (v7x-sized) fallback


def _choose_tm(tm_desired, m, per_row_bytes, resident_bytes):
    """Pick the M tile: as large as fits ~80% of VMEM (double-buffered tiles +
    resident weight block), then balanced against the real M to avoid padding
    waste on small problems."""
    cap = int(_vmem_cap_bytes() * 0.8)
    budget = max(cap - resident_bytes - (4 << 20), 2 << 20)
    tm = max(int(tm_desired), 16)
    while tm > 16 and 2 * tm * per_row_bytes > budget:
        tm //= 2
    tm = max(tm, 16)
    g = -(-m // tm)                      # number of tiles actually needed
    tm = _round_up(-(-m // g), 16)       # balance tiles, keep sublane-friendly
    return tm


def _compiler_params(needed_bytes):
    # ~80% of physical VMEM as the ceiling (headroom for compiler scratch):
    # ~51 MiB on 64-MiB parts (v7x), ~102 MiB on 128-MiB parts (v5e/v6e).
    cap = int(_vmem_cap_bytes() * 0.8)
    limit = int(min(max(needed_bytes + (4 << 20), 32 << 20), cap))
    return pltpu.CompilerParams(
        dimension_semantics=("parallel",), vmem_limit_bytes=limit
    )


# ---------------------------------------------------------------------------
# Pallas kernels
# ---------------------------------------------------------------------------
def _matmul_bias_kernel(a_ref, b_ref, bias_ref, o_ref):
    # offset conv: (TM, Kp) @ (Kp, Np) + (1, Np), bf16 in / f32 accumulate
    o_ref[...] = (
        jnp.dot(a_ref[...], b_ref[...], preferred_element_type=jnp.float32)
        + bias_ref[...]
    )


def _conv_relu_stats_kernel(cols_ref, w_ref, y_ref, stats_ref):
    # pass A: main deformable-conv matmul + ReLU, plus per-tile partial
    # per-channel sum / sum-of-squares for BatchNorm (reduced outside).
    y = jnp.dot(cols_ref[...], w_ref[...], preferred_element_type=jnp.float32)
    y = jnp.maximum(y, 0.0)                        # ReLU
    y_ref[...] = y.astype(y_ref.dtype)             # bf16 writeback
    s = jnp.sum(y, axis=0, keepdims=True)          # (1, Cp), from f32 acc
    sq = jnp.sum(y * y, axis=0, keepdims=True)     # (1, Cp)
    stats_ref[...] = jnp.concatenate([s, sq], axis=0)[None, :, :]


def _bn_apply_kernel(y_ref, scale_ref, shift_ref, o_ref):
    # pass B: y * scale + shift  (scale/shift fold mean/var/gamma/beta)
    o_ref[...] = y_ref[...].astype(jnp.float32) * scale_ref[...] + shift_ref[...]


# ---------------------------------------------------------------------------
# Pallas wrappers (tiled, lane-padded, bf16 operands)
# ---------------------------------------------------------------------------
def tiled_matmul_bias(a, b, bias, *, tm=1024):
    """(M, K) @ (K, N) + (N,), tiled over M; returns f32 (M, N)."""
    m, k = a.shape
    _, n = b.shape
    kp = _round_up(k, 128)
    np_ = _round_lane(n)

    per_row = kp * 2 + np_ * 4                       # bf16 in row + f32 out row
    resident = 2 * kp * np_ * 2 + np_ * 4            # weight block (dbl-buf) + bias
    tm = _choose_tm(tm, m, per_row, resident)
    mp = _round_up(m, tm)
    grid_m = mp // tm

    a_p = _pad2d(a.astype(jnp.bfloat16), mp, kp)     # producer is already bf16
    b_p = _pad2d(b.astype(jnp.bfloat16), kp, np_)
    bias_p = jnp.pad(bias.reshape(1, -1).astype(jnp.float32), ((0, 0), (0, np_ - n)))

    needed = 2 * (tm * kp * 2 + tm * np_ * 4) + resident
    out = pl.pallas_call(
        _matmul_bias_kernel,
        grid=(grid_m,),
        in_specs=[
            pl.BlockSpec((tm, kp), lambda i: (i, 0)),
            pl.BlockSpec((kp, np_), lambda i: (0, 0)),
            pl.BlockSpec((1, np_), lambda i: (0, 0)),
        ],
        out_specs=pl.BlockSpec((tm, np_), lambda i: (i, 0)),
        out_shape=jax.ShapeDtypeStruct((mp, np_), jnp.float32),
        compiler_params=_compiler_params(needed),
    )(a_p, b_p, bias_p)
    return out[:m, :n]


def conv_relu_bn(cols, w, gamma, beta, *, eps=1e-5, tm=1024):
    """Main conv matmul + ReLU + BatchNorm2d (batch stats), two tiled passes.

    Pass A writes bf16 activations + f32 partial stats; global stats are
    reduced in plain JAX (tiny per-channel math); pass B normalizes to f32.
    """
    m, k = cols.shape
    c_out = w.shape[1]
    kp = _round_up(k, 128)
    cp = _round_lane(c_out)

    per_row_a = kp * 2 + cp * 2                      # cols bf16 + y bf16
    per_row_b = cp * 2 + cp * 4                      # y bf16 in + f32 out
    per_row = max(per_row_a, per_row_b)
    resident = 2 * kp * cp * 2 + 2 * 8 * cp * 4      # weight block + stats tile
    tm = _choose_tm(tm, m, per_row, resident)
    mp = _round_up(m, tm)
    grid_m = mp // tm

    cols_p = _pad2d(cols.astype(jnp.bfloat16), mp, kp)   # padded rows/cols are zero
    w_p = _pad2d(w.astype(jnp.bfloat16), kp, cp)

    # ---- pass A: dot + ReLU (bf16 writeback) + per-tile partial stats -------
    needed_a = 2 * (tm * kp * 2 + tm * cp * 2 + 8 * cp * 4) + resident
    y, stats = pl.pallas_call(
        _conv_relu_stats_kernel,
        grid=(grid_m,),
        in_specs=[
            pl.BlockSpec((tm, kp), lambda i: (i, 0)),
            pl.BlockSpec((kp, cp), lambda i: (0, 0)),
        ],
        out_specs=[
            pl.BlockSpec((tm, cp), lambda i: (i, 0)),
            pl.BlockSpec((1, 2, cp), lambda i: (i, 0, 0)),
        ],
        out_shape=[
            jax.ShapeDtypeStruct((mp, cp), jnp.bfloat16),
            jax.ShapeDtypeStruct((grid_m, 2, cp), jnp.float32),
        ],
        compiler_params=_compiler_params(needed_a),
    )(cols_p, w_p)

    # ---- global BN stats (tiny per-channel math in plain JAX) ---------------
    # Padded rows of cols are zero -> y == 0 after ReLU -> contribute 0 to the
    # sums; divide by the real row count so stats are unbiased by padding.
    total = jnp.sum(stats[:, 0, :], axis=0)
    total_sq = jnp.sum(stats[:, 1, :], axis=0)
    mean = total / m
    var = jnp.maximum(total_sq / m - mean * mean, 0.0)   # biased var (PyTorch BN fwd)
    gamma_p = jnp.pad(gamma.astype(jnp.float32), (0, cp - c_out))
    beta_p = jnp.pad(beta.astype(jnp.float32), (0, cp - c_out))
    scale = gamma_p * jax.lax.rsqrt(var + eps)
    shift = beta_p - mean * scale

    # ---- pass B: normalize (bf16 in, f32 out) --------------------------------
    needed_b = 2 * (tm * cp * 2 + tm * cp * 4) + 2 * 2 * cp * 4
    out = pl.pallas_call(
        _bn_apply_kernel,
        grid=(grid_m,),
        in_specs=[
            pl.BlockSpec((tm, cp), lambda i: (i, 0)),
            pl.BlockSpec((1, cp), lambda i: (0, 0)),
            pl.BlockSpec((1, cp), lambda i: (0, 0)),
        ],
        out_specs=pl.BlockSpec((tm, cp), lambda i: (i, 0)),
        out_shape=jax.ShapeDtypeStruct((mp, cp), jnp.float32),
        compiler_params=_compiler_params(needed_b),
    )(y, scale.reshape(1, cp), shift.reshape(1, cp))

    return out[:m, :c_out]


# ---------------------------------------------------------------------------
# JAX glue: channels-last im2col for the offset conv, and deformable
# bilinear im2col (data-dependent gather stays in plain JAX, bf16 producer).
# ---------------------------------------------------------------------------
def im2col_regular_nhwc(x_nhwc, k, stride, pad):
    """x: (N, H, W, C) -> ((N*Ho*Wo, k*k*C) bf16, (Ho, Wo)); col order (tap, c)."""
    n, h, w, c = x_nhwc.shape
    ho = (h + 2 * pad - k) // stride + 1
    wo = (w + 2 * pad - k) // stride + 1
    xp = jnp.pad(x_nhwc, ((0, 0), (pad, pad), (pad, pad), (0, 0)))
    patches = []
    for i in range(k):
        for j in range(k):
            patches.append(
                xp[:, i:i + stride * (ho - 1) + 1:stride,
                       j:j + stride * (wo - 1) + 1:stride, :]
            )
    p = jnp.stack(patches, axis=3)                      # (N, Ho, Wo, KK, C)
    # bf16 cast at the producer -> no separate full-slab f32 pad+cast later.
    return p.reshape(n * ho * wo, k * k * c).astype(jnp.bfloat16), (ho, wo)


def deform_im2col_nhwc(x_nhwc, offsets, k, stride, pad):
    """Bilinear-sampled im2col, channels-last, bf16 output.

    x_nhwc:  (N, H, W, C) f32
    offsets: (N, Ho, Wo, KK, 2) with (dy, dx) per tap t = i*k + j
             (torchvision / mmcv DeformConv channel ordering).
    Returns (N*Ho*Wo, KK*C) bf16 with column order (tap, c).
    """
    # TODO(synk): fully fusing this data-dependent gather into pass A (x in HBM
    # via memory_space=pl.ANY + per-row DMA / in-VMEM take) is the next step;
    # here we use a single flattened jnp.take per bilinear corner, which is the
    # TPU-friendly XLA gather form (row gathers over an (N*H*W, C) slab).
    n, h, w, c = x_nhwc.shape
    kk = k * k
    _, ho, wo, _, _ = offsets.shape
    x_flat = x_nhwc.reshape(n * h * w, c)

    i_idx = jnp.repeat(jnp.arange(k), k).astype(jnp.float32)  # (KK,)
    j_idx = jnp.tile(jnp.arange(k), k).astype(jnp.float32)    # (KK,)
    base_y = (jnp.arange(ho, dtype=jnp.float32) * stride - pad)[:, None] + i_idx[None, :]
    base_x = (jnp.arange(wo, dtype=jnp.float32) * stride - pad)[:, None] + j_idx[None, :]

    dy = offsets[..., 0].astype(jnp.float32)                  # (N, Ho, Wo, KK)
    dx = offsets[..., 1].astype(jnp.float32)
    py = base_y[None, :, None, :] + dy
    px = base_x[None, None, :, :] + dx

    y0 = jnp.floor(py)
    x0 = jnp.floor(px)
    wy1 = py - y0
    wx1 = px - x0
    wy0 = 1.0 - wy1
    wx0 = 1.0 - wx1

    batch_off = (jnp.arange(n, dtype=jnp.int32) * (h * w)).reshape(n, 1, 1, 1)

    def gather(yi, xi):
        valid = (yi >= 0) & (yi <= h - 1) & (xi >= 0) & (xi <= w - 1)
        yc = jnp.clip(yi, 0, h - 1).astype(jnp.int32)
        xc = jnp.clip(xi, 0, w - 1).astype(jnp.int32)
        idx = batch_off + yc * w + xc                          # (N, Ho, Wo, KK)
        v = jnp.take(x_flat, idx, axis=0)                      # (N, Ho, Wo, KK, C)
        return v * valid[..., None].astype(x_flat.dtype)

    # fold corner weights into the accumulation; output is already matmul-ready
    # (tap, channel) order -> no full-slab transpose afterwards.
    acc = gather(y0, x0) * (wy0 * wx0)[..., None]
    acc = acc + gather(y0, x0 + 1.0) * (wy0 * wx1)[..., None]
    acc = acc + gather(y0 + 1.0, x0) * (wy1 * wx0)[..., None]
    acc = acc + gather(y0 + 1.0, x0 + 1.0) * (wy1 * wx1)[..., None]
    return acc.astype(jnp.bfloat16).reshape(n * ho * wo, kk * c)


# ---------------------------------------------------------------------------
# Module forward: DeformConvPack -> ReLU -> BatchNorm2d (training-mode stats)
# ---------------------------------------------------------------------------
def deformable_conv_with_activation(x, params, *, k=3, stride=1, pad=1,
                                    eps=1e-5, tm=1024):
    n, c_in, h, w = x.shape
    kk = k * k
    c_out = params["conv_w"].shape[0]

    x_nhwc = jnp.transpose(x, (0, 2, 3, 1))                    # channels-last once

    # 1) conv_offset (regular conv, bias=True) via im2col + tiled Pallas matmul.
    #    NOTE: matmul operands are bf16 (training-grade offset precision).
    cols_off, (ho, wo) = im2col_regular_nhwc(x_nhwc, k, stride, pad)   # (M, KK*C_in)
    w_off_flat = (
        jnp.transpose(params["offset_w"], (0, 2, 3, 1))        # (2KK, k, k, C_in)
        .reshape(2 * kk, kk * c_in).T                          # (KK*C_in, 2KK)
    )
    off_flat = tiled_matmul_bias(cols_off, w_off_flat, params["offset_b"], tm=tm)
    offsets = off_flat.reshape(n, ho, wo, kk, 2)               # (dy, dx) per tap, f32

    # 2) Deformable bilinear sampling (im2col with learned offsets), channels-last.
    cols = deform_im2col_nhwc(x_nhwc, offsets, k, stride, pad)  # (M, KK*C_in) bf16

    # 3) Main conv matmul + ReLU + BatchNorm2d (batch stats), two tiled Pallas passes.
    w_flat = (
        jnp.transpose(params["conv_w"], (0, 2, 3, 1))          # (C_out, k, k, C_in)
        .reshape(c_out, kk * c_in).T                           # (KK*C_in, C_out)
    )
    out = conv_relu_bn(cols, w_flat, params["gamma"], params["beta"], eps=eps, tm=tm)
    return out.reshape(n, ho, wo, c_out).transpose(0, 3, 1, 2)  # back to NCHW f32


if __name__ == "__main__":
    key = jax.random.PRNGKey(0)
    kx, kw, ko, kb = jax.random.split(key, 4)

    N, C_in, H, W = 2, 4, 16, 16
    C_out, k = 8, 3

    x = jax.random.normal(kx, (N, C_in, H, W), jnp.float32)
    params = dict(
        # main deformable-conv weight (bias=False in the module)
        conv_w=jax.random.normal(kw, (C_out, C_in, k, k), jnp.float32) * 0.1,
        # DeformConvPack zero-inits conv_offset; small deterministic values here
        # so the bilinear sampling path is actually exercised.
        offset_w=jax.random.normal(ko, (2 * k * k, C_in, k, k), jnp.float32) * 0.05,
        offset_b=jax.random.normal(kb, (2 * k * k,), jnp.float32) * 0.05,
        # BatchNorm2d default affine init
        gamma=jnp.ones((C_out,), jnp.float32),
        beta=jnp.zeros((C_out,), jnp.float32),
    )

    y = deformable_conv_with_activation(x, params, k=k, stride=1, pad=1)
    jax.block_until_ready(y)
    assert y.shape == (N, C_out, H, W) and y.dtype == jnp.float32
    assert bool(jnp.all(jnp.isfinite(y)))
    print("KERNEL_OK")
</pallas_src>

<mosaic_0001>
module attributes {stable_mosaic.version = 11 : i64} {
  func.func @_matmul_bias_kernel(%arg0: i32, %arg1: memref<512x128xbf16, #tpu.memory_space<vmem>>, %arg2: memref<128x128xbf16, #tpu.memory_space<vmem>>, %arg3: memref<1x128xf32, #tpu.memory_space<vmem>>, %arg4: memref<512x128xf32, #tpu.memory_space<vmem>>) attributes {dimension_semantics = [#tpu.dimension_semantics<parallel>], iteration_bounds = array<i64: 1>, scalar_prefetch = 0 : i64, scratch_operands = 0 : i64, tpu.core_type = #tpu.core_type<tc>, window_params = [{transform_indices = @transform_0, window_bounds = array<i64: 512, 128>}, {pipeline_mode = #tpu.pipeline_mode<synchronous>, transform_indices = @transform_1, window_bounds = array<i64: 128, 128>}, {pipeline_mode = #tpu.pipeline_mode<synchronous>, transform_indices = @transform_2, window_bounds = array<i64: 1, 128>}, {transform_indices = @transform_3, window_bounds = array<i64: 512, 128>}]} {
    %c0 = arith.constant 0 : index
    %c0_0 = arith.constant 0 : index
    %0 = vector.load %arg1[%c0, %c0_0] : memref<512x128xbf16, #tpu.memory_space<vmem>>, vector<512x128xbf16>
    %c0_1 = arith.constant 0 : index
    %c0_2 = arith.constant 0 : index
    %1 = vector.load %arg2[%c0_1, %c0_2] : memref<128x128xbf16, #tpu.memory_space<vmem>>, vector<128x128xbf16>
    %cst = arith.constant dense<0.000000e+00> : vector<512x128xf32>
    %2 = tpu.matmul %0, %1, %cst {dimension_numbers = #tpu.dot_dimension_numbers<[1], [0], [0], [1], [0, 0, 1, 1], [], []>} : vector<512x128xbf16>, vector<128x128xbf16>, vector<512x128xf32> -> vector<512x128xf32>
    %c0_3 = arith.constant 0 : index
    %c0_4 = arith.constant 0 : index
    %3 = vector.load %arg3[%c0_3, %c0_4] : memref<1x128xf32, #tpu.memory_space<vmem>>, vector<1x128xf32>
    %4 = vector.broadcast %3 : vector<1x128xf32> to vector<512x128xf32>
    %5 = arith.addf %2, %4 : vector<512x128xf32>
    %c0_5 = arith.constant 0 : index
    %c0_6 = arith.constant 0 : index
    %6 = vector.load %arg4[%c0_5, %c0_6] : memref<512x128xf32, #tpu.memory_space<vmem>>, vector<512x128xf32>
    tpu.vector_store %arg4[%c0_5, %c0_6], %5 {strides = array<i32>} : memref<512x128xf32, #tpu.memory_space<vmem>>, vector<512x128xf32>,
    return
  }
  func.func @transform_0(%arg0: i32) -> (i32, i32) {
    %c0_i32 = arith.constant 0 : i32
    %c0_i32_0 = arith.constant 0 : i32
    return %arg0, %c0_i32 : i32, i32
  }
  func.func @transform_1(%arg0: i32) -> (i32, i32) {
    %c0_i32 = arith.constant 0 : i32
    %c0_i32_0 = arith.constant 0 : i32
    %c0_i32_1 = arith.constant 0 : i32
    return %c0_i32, %c0_i32_0 : i32, i32
  }
  func.func @transform_2(%arg0: i32) -> (i32, i32) {
    %c0_i32 = arith.constant 0 : i32
    %c0_i32_0 = arith.constant 0 : i32
    %c0_i32_1 = arith.constant 0 : i32
    return %c0_i32, %c0_i32_0 : i32, i32
  }
  func.func @transform_3(%arg0: i32) -> (i32, i32) {
    %c0_i32 = arith.constant 0 : i32
    %c0_i32_0 = arith.constant 0 : i32
    return %arg0, %c0_i32 : i32, i32
  }
}

</mosaic_0001>

<llo_original>
// kernel: tpu_custom_call.1
$region0: #{tpu_custom_call.1}
  #allocation0 [shape = 'u32[]', space=smem, size = 0x4, offset = 0x4, fixed_abs, tag = 'smem constant byte address 0x4 - core index']
  #allocation1 [shape = 'u32[144,128]{1,0:T(1,128)}', space=vmem, size = 0x12000, scoped, tag = 'internal scratch']
  %s0 = inlined_call_operand.hbm [shape: bf16[512,128], index: 0, kind: input, shape index: {}]
  %s1 = inlined_call_operand.hbm [shape: bf16[128,128], index: 1, kind: input, shape index: {}]
  %s2 = inlined_call_operand.vmem [shape: f32[1,128], index: 2, kind: input, shape index: {}]
  %s3 = inlined_call_operand.hbm [shape: f32[512,128], index: 3, kind: output, shape index: {}]
  %s4 = sld [smem:[#allocation0]]
  $region30: #{tpu_custom_call.1} parent=0
    _
  %s6 = ssub.s32 1, %s4
  %s7 = scalar_select 0, %s6, %s4
  $region1: #{tpu_custom_call.1} parent=0
    #allocation2 [shape = 'u8[131072]{0}', space=vmem, size = 0x20000, scoped, tag = 'input window, operand 0, single buffered']
    #allocation3 [shape = 's32[1]{0}', space=sflag, size = 0x4, scoped, tag = 'scoped memory for tpu_custom_call.1']
    #allocation4 [shape = 's32[1]{0}', space=sflag, size = 0x4, scoped, tag = 'scoped memory for tpu_custom_call.1']
    #allocation5 [shape = 'u8[32768]{0}', space=vmem, size = 0x8000, scoped, tag = 'input window, operand 1, single buffered']
    #allocation6 [shape = 's32[1]{0}', space=sflag, size = 0x4, scoped, tag = 'scoped memory for tpu_custom_call.1']
    #allocation7 [shape = 'u8[262144]{0}', space=vmem, size = 0x40000, scoped, tag = 'output window, operand 0, single buffered']
    %8 = vsyncpa [#allocation3], 0
    %9 = vsyncpa [#allocation6], 0
    %10 = vsyncpa [#allocation4], 0
    // Predicated region
    $region2: #{tpu_custom_call.1} parent=1 // pred_check
      _
    $region3: #{tpu_custom_call.1} parent=1 // pred_check_branch
      %12 = sbr.rel (0) target = $region5
    $region4: #{tpu_custom_call.1} parent=1 // pred_region
      %s14 = ssub.s32 4096, 4096
      %15 = vsyncadd [#allocation3], %s14
      %s16 = sshll.u32 [#allocation2], 4
      %s17 = int_to_ptr.vmem [resolvable:$true] %s16
      %22 = dma.hbm_to_vmem [thread:$0]  %s0, 4096, %s17, [#allocation3], 64, 64, 4
    $region5: #{tpu_custom_call.1} parent=1 // pred_fallthru
      _
    // Predicated region
    $region6: #{tpu_custom_call.1} parent=1 // pred_check
      _
    $region7: #{tpu_custom_call.1} parent=1 // pred_check_branch
      %24 = sbr.rel (0) target = $region9
    $region8: #{tpu_custom_call.1} parent=1 // pred_region
      %s26 = ssub.s32 1024, 1024
      %27 = vsyncadd [#allocation6], %s26
      %s28 = sshll.u32 [#allocation5], 4
      %s29 = int_to_ptr.vmem [resolvable:$true] %s28
      %34 = dma.hbm_to_vmem [thread:$0]  %s1, 1024, %s29, [#allocation6], 64, 64, 4
    $region9: #{tpu_custom_call.1} parent=1 // pred_fallthru
      _
    // Predicated region
    $region10: #{tpu_custom_call.1} parent=1 // pred_check
      _
    $region11: #{tpu_custom_call.1} parent=1 // pred_check_branch
      %36 = sbr.rel (0) target = $region13
    $region12: #{tpu_custom_call.1} parent=1 // pred_region
      _
    $region13: #{tpu_custom_call.1} parent=1 // pred_fallthru
      _
    // Predicated region
    $region14: #{tpu_custom_call.1} parent=1 // pred_check
      _
    $region15: #{tpu_custom_call.1} parent=1 // pred_check_branch
      %38 = sbr.rel (0) target = $region17
    $region16: #{tpu_custom_call.1} parent=1 // pred_region
      %39 = dma.done [#allocation3], 4096
    $region17: #{tpu_custom_call.1} parent=1 // pred_fallthru
      _
    // Predicated region
    $region18: #{tpu_custom_call.1} parent=1 // pred_check
      _
    $region19: #{tpu_custom_call.1} parent=1 // pred_check_branch
      %41 = sbr.rel (0) target = $region21
    $region20: #{tpu_custom_call.1} parent=1 // pred_region
      %42 = dma.done [#allocation6], 1024
    $region21: #{tpu_custom_call.1} parent=1 // pred_fallthru
      _
    %v44 = vld [vmem:[#allocation2] sm:$0xf]
    %v45 = vld [vmem:[#allocation2 + $0x4] sm:$0xf]
    %v46 = vld [vmem:[#allocation2 + $0x8] sm:$0xf]
    %v47 = vld [vmem:[#allocation2 + $0xc] sm:$0xf]
    %v48 = vld [vmem:[#allocation2 + $0x10] sm:$0xf]
    %v49 = vld [vmem:[#allocation2 + $0x14] sm:$0xf]
    %v50 = vld [vmem:[#allocation2 + $0x18] sm:$0xf]
    %v51 = vld [vmem:[#allocation2 + $0x1c] sm:$0xf]
    %v52 = vld [vmem:[#allocation2 + $0x20] sm:$0xf]
    %v53 = vld [vmem:[#allocation2 + $0x24] sm:$0xf]
    %v54 = vld [vmem:[#allocation2 + $0x28] sm:$0xf]
    %v55 = vld [vmem:[#allocation2 + $0x2c] sm:$0xf]
    %v56 = vld [vmem:[#allocation2 + $0x30] sm:$0xf]
    %v57 = vld [vmem:[#allocation2 + $0x34] sm:$0xf]
    %v58 = vld [vmem:[#allocation2 + $0x38] sm:$0xf]
    %v59 = vld [vmem:[#allocation2 + $0x3c] sm:$0xf]
    %v60 = vld [vmem:[#allocation2 + $0x40] sm:$0xf]
    %v61 = vld [vmem:[#allocation2 + $0x44] sm:$0xf]
    %v62 = vld [vmem:[#allocation2 + $0x48] sm:$0xf]
    %v63 = vld [vmem:[#allocation2 + $0x4c] sm:$0xf]
    %v64 = vld [vmem:[#allocation2 + $0x50] sm:$0xf]
    %v65 = vld [vmem:[#allocation2 + $0x54] sm:$0xf]
    %v66 = vld [vmem:[#allocation2 + $0x58] sm:$0xf]
    %v67 = vld [vmem:[#allocation2 + $0x5c] sm:$0xf]
    %v68 = vld [vmem:[#allocation2 + $0x60] sm:$0xf]
    %v69 = vld [vmem:[#allocation2 + $0x64] sm:$0xf]
    %v70 = vld [vmem:[#allocation2 + $0x68] sm:$0xf]
    %v71 = vld [vmem:[#allocation2 + $0x6c] sm:$0xf]
    %v72 = vld [vmem:[#allocation2 + $0x70] sm:$0xf]
    %v73 = vld [vmem:[#allocation2 + $0x74] sm:$0xf]
    %v74 = vld [vmem:[#allocation2 + $0x78] sm:$0xf]
    %v75 = vld [vmem:[#allocation2 + $0x7c] sm:$0xf]
    %v76 = vld [vmem:[#allocation2 + $0x80] sm:$0xf]
    %v77 = vld [vmem:[#allocation2 + $0x84] sm:$0xf]
    %v78 = vld [vmem:[#allocation2 + $0x88] sm:$0xf]
    %v79 = vld [vmem:[#allocation2 + $0x8c] sm:$0xf]
    %v80 = vld [vmem:[#allocation2 + $0x90] sm:$0xf]
    %v81 = vld [vmem:[#allocation2 + $0x94] sm:$0xf]
    %v82 = vld [vmem:[#allocation2 + $0x98] sm:$0xf]
    %v83 = vld [vmem:[#allocation2 + $0x9c] sm:$0xf]
    %v84 = vld [vmem:[#allocation2 + $0xa0] sm:$0xf]
    %v85 = vld [vmem:[#allocation2 + $0xa4] sm:$0xf]
    %v86 = vld [vmem:[#allocation2 + $0xa8] sm:$0xf]
    %v87 = vld [vmem:[#allocation2 + $0xac] sm:$0xf]
    %v88 = vld [vmem:[#allocation2 + $0xb0] sm:$0xf]
    %v89 = vld [vmem:[#allocation2 + $0xb4] sm:$0xf]
    %v90 = vld [vmem:[#allocation2 + $0xb8] sm:$0xf]
    %v91 = vld [vmem:[#allocation2 + $0xbc] sm:$0xf]
    %v92 = vld [vmem:[#allocation2 + $0xc0] sm:$0xf]
    %v93 = vld [vmem:[#allocation2 + $0xc4] sm:$0xf]
    %v94 = vld [vmem:[#allocation2 + $0xc8] sm:$0xf]
    %v95 = vld [vmem:[#allocation2 + $0xcc] sm:$0xf]
    %v96 = vld [vmem:[#allocation2 + $0xd0] sm:$0xf]
    %v97 = vld [vmem:[#allocation2 + $0xd4] sm:$0xf]
    %v98 = vld [vmem:[#allocation2 + $0xd8] sm:$0xf]
    %v99 = vld [vmem:[#allocation2 + $0xdc] sm:$0xf]
    %v100 = vld [vmem:[#allocation2 + $0xe0] sm:$0xf]
    %v101 = vld [vmem:[#allocation2 + $0xe4] sm:$0xf]
    %v102 = vld [vmem:[#allocation2 + $0xe8] sm:$0xf]
    %v103 = vld [vmem:[#allocation2 + $0xec] sm:$0xf]
    %v104 = vld [vmem:[#allocation2 + $0xf0] sm:$0xf]
    %v105 = vld [vmem:[#allocation2 + $0xf4] sm:$0xf]
    %v106 = vld [vmem:[#allocation2 + $0xf8] sm:$0xf]
    %v107 = vld [vmem:[#allocation2 + $0xfc] sm:$0xf]
    %v108 = vld [vmem:[#allocation5] sm:$0xf]
    %v109 = vld [vmem:[#allocation5 + $0x4] sm:$0xf]
    %v110 = vld [vmem:[#allocation5 + $0x8] sm:$0xf]
    %v111 = vld [vmem:[#allocation5 + $0xc] sm:$0xf]
    %v112 = vld [vmem:[#allocation5 + $0x10] sm:$0xf]
    %v113 = vld [vmem:[#allocation5 + $0x14] sm:$0xf]
    %v114 = vld [vmem:[#allocation5 + $0x18] sm:$0xf]
    %v115 = vld [vmem:[#allocation5 + $0x1c] sm:$0xf]
    %v116 = vld [vmem:[#allocation5 + $0x20] sm:$0xf]
    %v117 = vld [vmem:[#allocation5 + $0x24] sm:$0xf]
    %v118 = vld [vmem:[#allocation5 + $0x28] sm:$0xf]
    %v119 = vld [vmem:[#allocation5 + $0x2c] sm:$0xf]
    %v120 = vld [vmem:[#allocation5 + $0x30] sm:$0xf]
    %v121 = vld [vmem:[#allocation5 + $0x34] sm:$0xf]
    %v122 = vld [vmem:[#allocation5 + $0x38] sm:$0xf]
    %v123 = vld [vmem:[#allocation5 + $0x3c] sm:$0xf]
    %v124 = vld [vmem:[%s2] sm:$0x1]
    %v126 = vlaneseq
    %v127 = vshrl.u32 %v126, 7
    %v128 = vsub.s32 0, %v127
    %v129 = vrot.slane %v124, %v128
    %v195 = vunpack.c.l.b16 %v44
    %v196 = vunpack.c.l.b16 %v45
    %v197 = vunpack.c.l.b16 %v46
    %v198 = vunpack.c.l.b16 %v47
    %v199 = vunpack.c.l.b16 %v48
    %v200 = vunpack.c.l.b16 %v49
    %v201 = vunpack.c.l.b16 %v50
    %v202 = vunpack.c.l.b16 %v51
    %v203 = vunpack.c.l.b16 %v52
    %v204 = vunpack.c.l.b16 %v53
    %v205 = vunpack.c.l.b16 %v54
    %v206 = vunpack.c.l.b16 %v55
    %v207 = vunpack.c.l.b16 %v56
    %v208 = vunpack.c.l.b16 %v57
    %v209 = vunpack.c.l.b16 %v58
    %v210 = vunpack.c.l.b16 %v59
    %v211 = vunpack.c.l.b16 %v60
    %v212 = vunpack.c.l.b16 %v61
    %v213 = vunpack.c.l.b16 %v62
    %v214 = vunpack.c.l.b16 %v63
    %v215 = vunpack.c.l.b16 %v64
    %v216 = vunpack.c.l.b16 %v65
    %v217 = vunpack.c.l.b16 %v66
    %v218 = vunpack.c.l.b16 %v67
    %v219 = vunpack.c.l.b16 %v68
    %v220 = vunpack.c.l.b16 %v69
    %v221 = vunpack.c.l.b16 %v70
    %v222 = vunpack.c.l.b16 %v71
    %v223 = vunpack.c.l.b16 %v72
    %v224 = vunpack.c.l.b16 %v73
    %v225 = vunpack.c.l.b16 %v74
    %v226 = vunpack.c.l.b16 %v75
    %v227 = vunpack.c.l.b16 %v76
    %v228 = vunpack.c.l.b16 %v77
    %v229 = vunpack.c.l.b16 %v78
    %v230 = vunpack.c.l.b16 %v79
    %v231 = vunpack.c.l.b16 %v80
    %v232 = vunpack.c.l.b16 %v81
    %v233 = vunpack.c.l.b16 %v82
    %v234 = vunpack.c.l.b16 %v83
    %v235 = vunpack.c.l.b16 %v84
    %v236 = vunpack.c.l.b16 %v85
    %v237 = vunpack.c.l.b16 %v86
    %v238 = vunpack.c.l.b16 %v87
    %v239 = vunpack.c.l.b16 %v88
    %v240 = vunpack.c.l.b16 %v89
    %v241 = vunpack.c.l.b16 %v90
    %v242 = vunpack.c.l.b16 %v91
    %v243 = vunpack.c.l.b16 %v92
    %v244 = vunpack.c.l.b16 %v93
    %v245 = vunpack.c.l.b16 %v94
    %v246 = vunpack.c.l.b16 %v95
    %v247 = vunpack.c.l.b16 %v96
    %v248 = vunpack.c.l.b16 %v97
    %v249 = vunpack.c.l.b16 %v98
    %v250 = vunpack.c.l.b16 %v99
    %v251 = vunpack.c.l.b16 %v100
    %v252 = vunpack.c.l.b16 %v101
    %v253 = vunpack.c.l.b16 %v102
    %v254 = vunpack.c.l.b16 %v103
    %v255 = vunpack.c.l.b16 %v104
    %v256 = vunpack.c.l.b16 %v105
    %v257 = vunpack.c.l.b16 %v106
    %v258 = vunpack.c.l.b16 %v107
    %v259 = vpack.c.b16 %v196, %v195
    %v260 = vpack.c.b16 %v198, %v197
    %v261 = vpack.c.b16 %v200, %v199
    %v262 = vpack.c.b16 %v202, %v201
    %v263 = vpack.c.b16 %v204, %v203
    %v264 = vpack.c.b16 %v206, %v205
    %v265 = vpack.c.b16 %v208, %v207
    %v266 = vpack.c.b16 %v210, %v209
    %v267 = vpack.c.b16 %v212, %v211
    %v268 = vpack.c.b16 %v214, %v213
    %v269 = vpack.c.b16 %v216, %v215
    %v270 = vpack.c.b16 %v218, %v217
    %v271 = vpack.c.b16 %v220, %v219
    %v272 = vpack.c.b16 %v222, %v221
    %v273 = vpack.c.b16 %v224, %v223
    %v274 = vpack.c.b16 %v226, %v225
    %v275 = vpack.c.b16 %v228, %v227
    %v276 = vpack.c.b16 %v230, %v229
    %v277 = vpack.c.b16 %v232, %v231
    %v278 = vpack.c.b16 %v234, %v233
    %v279 = vpack.c.b16 %v236, %v235
    %v280 = vpack.c.b16 %v238, %v237
    %v281 = vpack.c.b16 %v240, %v239
    %v282 = vpack.c.b16 %v242, %v241
    %v283 = vpack.c.b16 %v244, %v243
    %v284 = vpack.c.b16 %v246, %v245
    %v285 = vpack.c.b16 %v248, %v247
    %v286 = vpack.c.b16 %v250, %v249
    %v287 = vpack.c.b16 %v252, %v251
    %v288 = vpack.c.b16 %v254, %v253
    %v289 = vpack.c.b16 %v256, %v255
    %v290 = vpack.c.b16 %v258, %v257
    %v339 = vunpack.c.l.b16 %v108
    %v340 = vunpack.c.l.b16 %v109
    %v341 = vunpack.c.l.b16 %v110
    %v342 = vunpack.c.l.b16 %v111
    %v343 = vunpack.c.l.b16 %v112
    %v344 = vunpack.c.l.b16 %v113
    %v345 = vunpack.c.l.b16 %v114
    %v346 = vunpack.c.l.b16 %v115
    %v347 = vunpack.c.l.b16 %v116
    %v348 = vunpack.c.l.b16 %v117
    %v349 = vunpack.c.l.b16 %v118
    %v350 = vunpack.c.l.b16 %v119
    %v351 = vunpack.c.l.b16 %v120
    %v352 = vunpack.c.l.b16 %v121
    %v353 = vunpack.c.l.b16 %v122
    %v354 = vunpack.c.l.b16 %v123
    %v355 = vpack.c.b16 %v340, %v339
    %v356 = vpack.c.b16 %v342, %v341
    %v357 = vpack.c.b16 %v344, %v343
    %v358 = vpack.c.b16 %v346, %v345
    %v359 = vpack.c.b16 %v348, %v347
    %v360 = vpack.c.b16 %v350, %v349
    %v361 = vpack.c.b16 %v352, %v351
    %v362 = vpack.c.b16 %v354, %v353
    %371 = vmatprep.subr.bf16.mxu0 0
    %372 = vmatpush1.bf16.msra.mxu0 %v362
    %373 = vmatprep.subr.bf16.mxu0 0
    %374 = vmatpush1.bf16.msra.mxu0 %v361
    %375 = vmatprep.subr.bf16.mxu0 0
    %376 = vmatpush1.bf16.msra.mxu0 %v360
    %377 = vmatprep.subr.bf16.mxu0 0
    %378 = vmatpush1.bf16.msra.mxu0 %v359
    %379 = vmatprep.subr.bf16.mxu0 0
    %380 = vmatpush1.bf16.msra.mxu0 %v358
    %381 = vmatprep.subr.bf16.mxu0 0
    %382 = vmatpush1.bf16.msra.mxu0 %v357
    %383 = vmatprep.subr.bf16.mxu0 0
    %384 = vmatpush1.bf16.msra.mxu0 %v356
    %385 = vmatprep.subr.bf16.mxu0 0
    %386 = vmatpush1.bf16.msra.mxu0 %v355
    %387 = vmatprep.subr.bf16.mxu0 0
    %388 = vmatpush2.bf16.msra.mxu0 0
    %389 = vmatprep.subr.bf16.mxu0 0
    %390 = vmatpush2.bf16.msra.mxu0 0
    %391 = vmatprep.subr.bf16.mxu0 0
    %392 = vmatpush2.bf16.msra.mxu0 0
    %393 = vmatprep.subr.bf16.mxu0 0
    %394 = vmatpush2.bf16.msra.mxu0 0
    %395 = vmatprep.subr.bf16.mxu0 0
    %396 = vmatpush2.bf16.msra.mxu0 0
    %397 = vmatprep.subr.bf16.mxu0 0
    %398 = vmatpush2.bf16.msra.mxu0 0
    %399 = vmatprep.subr.bf16.mxu0 0
    %400 = vmatpush2.bf16.msra.mxu0 0
    %401 = vmatprep.subr.bf16.mxu0 0
    %402 = vmatpush2.bf16.msra.mxu0 0
    %403 = vmatprep.mubr.bf16.mxu0 0
    %404 = vmatmul.mubr.bf16.gmra.mxu0 %v259
    %v405 = vpop.f32.mrf.mxu0
    %v406 = vadd.f32 %v129, %v405
    %v407 = vpop.f32.mrf.mxu0
    %v408 = vpop.f32.mrf.mxu0
    %v409 = vadd.f32 %v129, %v408
    %v410 = vpop.f32.mrf.mxu0
    %411 = vmatprep.mubr.bf16.mxu0 0
    %412 = vmatmul.mubr.bf16.gmra.mxu0 %v260
    %v413 = vpop.f32.mrf.mxu0
    %v414 = vadd.f32 %v129, %v413
    %v415 = vpop.f32.mrf.mxu0
    %v416 = vpop.f32.mrf.mxu0
    %v417 = vadd.f32 %v129, %v416
    %v418 = vpop.f32.mrf.mxu0
    %419 = vmatprep.mubr.bf16.mxu0 0
    %420 = vmatmul.mubr.bf16.gmra.mxu0 %v261
    %v421 = vpop.f32.mrf.mxu0
    %v422 = vadd.f32 %v129, %v421
    %v423 = vpop.f32.mrf.mxu0
    %v424 = vpop.f32.mrf.mxu0
    %v425 = vadd.f32 %v129, %v424
    %v426 = vpop.f32.mrf.mxu0
    %427 = vmatprep.mubr.bf16.mxu0 0
    %428 = vmatmul.mubr.bf16.gmra.mxu0 %v262
    %v429 = vpop.f32.mrf.mxu0
    %v430 = vadd.f32 %v129, %v429
    %v431 = vpop.f32.mrf.mxu0
    %v432 = vpop.f32.mrf.mxu0
    %v433 = vadd.f32 %v129, %v432
    %v434 = vpop.f32.mrf.mxu0
    %435 = vmatprep.mubr.bf16.mxu0 0
    %436 = vmatmul.mubr.bf16.gmra.mxu0 %v263
    %v437 = vpop.f32.mrf.mxu0
    %v438 = vadd.f32 %v129, %v437
    %v439 = vpop.f32.mrf.mxu0
    %v440 = vpop.f32.mrf.mxu0
    %v441 = vadd.f32 %v129, %v440
    %v442 = vpop.f32.mrf.mxu0
    %443 = vmatprep.mubr.bf16.mxu0 0
    %444 = vmatmul.mubr.bf16.gmra.mxu0 %v264
    %v445 = vpop.f32.mrf.mxu0
    %v446 = vadd.f32 %v129, %v445
    %v447 = vpop.f32.mrf.mxu0
    %v448 = vpop.f32.mrf.mxu0
    %v449 = vadd.f32 %v129, %v448
    %v450 = vpop.f32.mrf.mxu0
    %451 = vmatprep.mubr.bf16.mxu0 0
    %452 = vmatmul.mubr.bf16.gmra.mxu0 %v265
    %v453 = vpop.f32.mrf.mxu0
    %v454 = vadd.f32 %v129, %v453
    %v455 = vpop.f32.mrf.mxu0
    %v456 = vpop.f32.mrf.mxu0
    %v457 = vadd.f32 %v129, %v456
    %v458 = vpop.f32.mrf.mxu0
    %459 = vmatprep.mubr.bf16.mxu0 0
    %460 = vmatmul.mubr.bf16.gmra.mxu0 %v266
    %v461 = vpop.f32.mrf.mxu0
    %v462 = vadd.f32 %v129, %v461
    %v463 = vpop.f32.mrf.mxu0
    %v464 = vpop.f32.mrf.mxu0
    %v465 = vadd.f32 %v129, %v464
    %v466 = vpop.f32.mrf.mxu0
    %467 = vmatprep.mubr.bf16.mxu0 0
    %468 = vmatmul.mubr.bf16.gmra.mxu0 %v267
    %v469 = vpop.f32.mrf.mxu0
    %v470 = vadd.f32 %v129, %v469
    %v471 = vpop.f32.mrf.mxu0
    %v472 = vpop.f32.mrf.mxu0
    %v473 = vadd.f32 %v129, %v472
    %v474 = vpop.f32.mrf.mxu0
    %475 = vmatprep.mubr.bf16.mxu0 0
    %476 = vmatmul.mubr.bf16.gmra.mxu0 %v268
    %v477 = vpop.f32.mrf.mxu0
    %v478 = vadd.f32 %v129, %v477
    %v479 = vpop.f32.mrf.mxu0
    %v480 = vpop.f32.mrf.mxu0
    %v481 = vadd.f32 %v129, %v480
    %v482 = vpop.f32.mrf.mxu0
    %483 = vmatprep.mubr.bf16.mxu0 0
    %484 = vmatmul.mubr.bf16.gmra.mxu0 %v269
    %v485 = vpop.f32.mrf.mxu0
    %v486 = vadd.f32 %v129, %v485
    %v487 = vpop.f32.mrf.mxu0
    %v488 = vpop.f32.mrf.mxu0
    %v489 = vadd.f32 %v129, %v488
    %v490 = vpop.f32.mrf.mxu0
    %491 = vmatprep.mubr.bf16.mxu0 0
    %492 = vmatmul.mubr.bf16.gmra.mxu0 %v270
    %v493 = vpop.f32.mrf.mxu0
    %v494 = vadd.f32 %v129, %v493
    %v495 = vpop.f32.mrf.mxu0
    %v496 = vpop.f32.mrf.mxu0
    %v497 = vadd.f32 %v129, %v496
    %v498 = vpop.f32.mrf.mxu0
    %499 = vmatprep.mubr.bf16.mxu0 0
    %500 = vmatmul.mubr.bf16.gmra.mxu0 %v271
    %v501 = vpop.f32.mrf.mxu0
    %v502 = vadd.f32 %v129, %v501
    %v503 = vpop.f32.mrf.mxu0
    %v504 = vpop.f32.mrf.mxu0
    %v505 = vadd.f32 %v129, %v504
    %v506 = vpop.f32.mrf.mxu0
    %507 = vmatprep.mubr.bf16.mxu0 0
    %508 = vmatmul.mubr.bf16.gmra.mxu0 %v272
    %v509 = vpop.f32.mrf.mxu0
    %v510 = vadd.f32 %v129, %v509
    %v511 = vpop.f32.mrf.mxu0
    %v512 = vpop.f32.mrf.mxu0
    %v513 = vadd.f32 %v129, %v512
    %v514 = vpop.f32.mrf.mxu0
    %515 = vmatprep.mubr.bf16.mxu0 0
    %516 = vmatmul.mubr.bf16.gmra.mxu0 %v273
    %v517 = vpop.f32.mrf.mxu0
    %v518 = vadd.f32 %v129, %v517
    %v519 = vpop.f32.mrf.mxu0
    %v520 = vpop.f32.mrf.mxu0
    %v521 = vadd.f32 %v129, %v520
    %v522 = vpop.f32.mrf.mxu0
    %523 = vmatprep.mubr.bf16.mxu0 0
    %524 = vmatmul.mubr.bf16.gmra.mxu0 %v274
    %v525 = vpop.f32.mrf.mxu0
    %v526 = vadd.f32 %v129, %v525
    %v527 = vpop.f32.mrf.mxu0
    %v528 = vpop.f32.mrf.mxu0
    %v529 = vadd.f32 %v129, %v528
    %v530 = vpop.f32.mrf.mxu0
    %531 = vmatprep.mubr.bf16.mxu0 0
    %532 = vmatmul.mubr.bf16.gmra.mxu0 %v275
    %v533 = vpop.f32.mrf.mxu0
    %v534 = vadd.f32 %v129, %v533
    %v535 = vpop.f32.mrf.mxu0
    %v536 = vpop.f32.mrf.mxu0
    %v537 = vadd.f32 %v129, %v536
    %v538 = vpop.f32.mrf.mxu0
    %539 = vmatprep.mubr.bf16.mxu0 0
    %540 = vmatmul.mubr.bf16.gmra.mxu0 %v276
    %v541 = vpop.f32.mrf.mxu0
    %v542 = vadd.f32 %v129, %v541
    %v543 = vpop.f32.mrf.mxu0
    %v544 = vpop.f32.mrf.mxu0
    %v545 = vadd.f32 %v129, %v544
    %v546 = vpop.f32.mrf.mxu0
    %547 = vmatprep.mubr.bf16.mxu0 0
    %548 = vmatmul.mubr.bf16.gmra.mxu0 %v277
    %v549 = vpop.f32.mrf.mxu0
    %v550 = vadd.f32 %v129, %v549
    %v551 = vpop.f32.mrf.mxu0
    %v552 = vpop.f32.mrf.mxu0
    %v553 = vadd.f32 %v129, %v552
    %v554 = vpop.f32.mrf.mxu0
    %555 = vmatprep.mubr.bf16.mxu0 0
    %556 = vmatmul.mubr.bf16.gmra.mxu0 %v278
    %v557 = vpop.f32.mrf.mxu0
    %v558 = vadd.f32 %v129, %v557
    %v559 = vpop.f32.mrf.mxu0
    %v560 = vpop.f32.mrf.mxu0
    %v561 = vadd.f32 %v129, %v560
    %v562 = vpop.f32.mrf.mxu0
    %563 = vmatprep.mubr.bf16.mxu0 0
    %564 = vmatmul.mubr.bf16.gmra.mxu0 %v279
    %v565 = vpop.f32.mrf.mxu0
    %v566 = vadd.f32 %v129, %v565
    %v567 = vpop.f32.mrf.mxu0
    %v568 = vpop.f32.mrf.mxu0
    %v569 = vadd.f32 %v129, %v568
    %v570 = vpop.f32.mrf.mxu0
    %571 = vmatprep.mubr.bf16.mxu0 0
    %572 = vmatmul.mubr.bf16.gmra.mxu0 %v280
    %v573 = vpop.f32.mrf.mxu0
    %v574 = vadd.f32 %v129, %v573
    %v575 = vpop.f32.mrf.mxu0
    %v576 = vpop.f32.mrf.mxu0
    %v577 = vadd.f32 %v129, %v576
    %v578 = vpop.f32.mrf.mxu0
    %579 = vmatprep.mubr.bf16.mxu0 0
    %580 = vmatmul.mubr.bf16.gmra.mxu0 %v281
    %v581 = vpop.f32.mrf.mxu0
    %v582 = vadd.f32 %v129, %v581
    %v583 = vpop.f32.mrf.mxu0
    %v584 = vpop.f32.mrf.mxu0
    %v585 = vadd.f32 %v129, %v584
    %v586 = vpop.f32.mrf.mxu0
    %587 = vmatprep.mubr.bf16.mxu0 0
    %588 = vmatmul.mubr.bf16.gmra.mxu0 %v282
    %v589 = vpop.f32.mrf.mxu0
    %v590 = vadd.f32 %v129, %v589
    %v591 = vpop.f32.mrf.mxu0
    %v592 = vpop.f32.mrf.mxu0
    %v593 = vadd.f32 %v129, %v592
    %v594 = vpop.f32.mrf.mxu0
    %595 = vmatprep.mubr.bf16.mxu0 0
    %596 = vmatmul.mubr.bf16.gmra.mxu0 %v283
    %v597 = vpop.f32.mrf.mxu0
    %v598 = vadd.f32 %v129, %v597
    %v599 = vpop.f32.mrf.mxu0
    %v600 = vpop.f32.mrf.mxu0
    %v601 = vadd.f32 %v129, %v600
    %v602 = vpop.f32.mrf.mxu0
    %603 = vmatprep.mubr.bf16.mxu0 0
    %604 = vmatmul.mubr.bf16.gmra.mxu0 %v284
    %v605 = vpop.f32.mrf.mxu0
    %v606 = vadd.f32 %v129, %v605
    %v607 = vpop.f32.mrf.mxu0
    %v608 = vpop.f32.mrf.mxu0
    %v609 = vadd.f32 %v129, %v608
    %v610 = vpop.f32.mrf.mxu0
    %611 = vmatprep.mubr.bf16.mxu0 0
    %612 = vmatmul.mubr.bf16.gmra.mxu0 %v285
    %v613 = vpop.f32.mrf.mxu0
    %v614 = vadd.f32 %v129, %v613
    %v615 = vpop.f32.mrf.mxu0
    %v616 = vpop.f32.mrf.mxu0
    %v617 = vadd.f32 %v129, %v616
    %v618 = vpop.f32.mrf.mxu0
    %619 = vmatprep.mubr.bf16.mxu0 0
    %620 = vmatmul.mubr.bf16.gmra.mxu0 %v286
    %v621 = vpop.f32.mrf.mxu0
    %v622 = vadd.f32 %v129, %v621
    %v623 = vpop.f32.mrf.mxu0
    %v624 = vpop.f32.mrf.mxu0
    %v625 = vadd.f32 %v129, %v624
    %v626 = vpop.f32.mrf.mxu0
    %627 = vmatprep.mubr.bf16.mxu0 0
    %628 = vmatmul.mubr.bf16.gmra.mxu0 %v287
    %v629 = vpop.f32.mrf.mxu0
    %v630 = vadd.f32 %v129, %v629
    %v631 = vpop.f32.mrf.mxu0
    %v632 = vpop.f32.mrf.mxu0
    %v633 = vadd.f32 %v129, %v632
    %v634 = vpop.f32.mrf.mxu0
    %635 = vmatprep.mubr.bf16.mxu0 0
    %636 = vmatmul.mubr.bf16.gmra.mxu0 %v288
    %v637 = vpop.f32.mrf.mxu0
    %v638 = vadd.f32 %v129, %v637
    %v639 = vpop.f32.mrf.mxu0
    %v640 = vpop.f32.mrf.mxu0
    %v641 = vadd.f32 %v129, %v640
    %v642 = vpop.f32.mrf.mxu0
    %643 = vmatprep.mubr.bf16.mxu0 0
    %644 = vmatmul.mubr.bf16.gmra.mxu0 %v289
    %v645 = vpop.f32.mrf.mxu0
    %v646 = vadd.f32 %v129, %v645
    %v647 = vpop.f32.mrf.mxu0
    %v648 = vpop.f32.mrf.mxu0
    %v649 = vadd.f32 %v129, %v648
    %v650 = vpop.f32.mrf.mxu0
    %651 = vmatprep.mubr.bf16.mxu0 0
    %652 = vmatmul.mubr.bf16.gmra.mxu0 %v290
    %v653 = vpop.f32.mrf.mxu0
    %v654 = vadd.f32 %v129, %v653
    %v655 = vpop.f32.mrf.mxu0
    %v656 = vpop.f32.mrf.mxu0
    %v657 = vadd.f32 %v129, %v656
    %v658 = vpop.f32.mrf.mxu0
    %659 = vdwg.mxu0
    %660 = vst [vmem:[#allocation7] sm:$0xff] %v406
    %661 = vst [vmem:[#allocation7 + $0x8] sm:$0xff] %v409
    %662 = vst [vmem:[#allocation7 + $0x10] sm:$0xff] %v414
    %663 = vst [vmem:[#allocation7 + $0x18] sm:$0xff] %v417
    %664 = vst [vmem:[#allocation7 + $0x20] sm:$0xff] %v422
    %665 = vst [vmem:[#allocation7 + $0x28] sm:$0xff] %v425
    %666 = vst [vmem:[#allocation7 + $0x30] sm:$0xff] %v430
    %667 = vst [vmem:[#allocation7 + $0x38] sm:$0xff] %v433
    %668 = vst [vmem:[#allocation7 + $0x40] sm:$0xff] %v438
    %669 = vst [vmem:[#allocation7 + $0x48] sm:$0xff] %v441
    %670 = vst [vmem:[#allocation7 + $0x50] sm:$0xff] %v446
    %671 = vst [vmem:[#allocation7 + $0x58] sm:$0xff] %v449
    %672 = vst [vmem:[#allocation7 + $0x60] sm:$0xff] %v454
    %673 = vst [vmem:[#allocation7 + $0x68] sm:$0xff] %v457
    %674 = vst [vmem:[#allocation7 + $0x70] sm:$0xff] %v462
    %675 = vst [vmem:[#allocation7 + $0x78] sm:$0xff] %v465
    %676 = vst [vmem:[#allocation7 + $0x80] sm:$0xff] %v470
    %677 = vst [vmem:[#allocation7 + $0x88] sm:$0xff] %v473
    %678 = vst [vmem:[#allocation7 + $0x90] sm:$0xff] %v478
    %679 = vst [vmem:[#allocation7 + $0x98] sm:$0xff] %v481
    %680 = vst [vmem:[#allocation7 + $0xa0] sm:$0xff] %v486
    %681 = vst [vmem:[#allocation7 + $0xa8] sm:$0xff] %v489
    %682 = vst [vmem:[#allocation7 + $0xb0] sm:$0xff] %v494
    %683 = vst [vmem:[#allocation7 + $0xb8] sm:$0xff] %v497
    %684 = vst [vmem:[#allocation7 + $0xc0] sm:$0xff] %v502
    %685 = vst [vmem:[#allocation7 + $0xc8] sm:$0xff] %v505
    %686 = vst [vmem:[#allocation7 + $0xd0] sm:$0xff] %v510
    %687 = vst [vmem:[#allocation7 + $0xd8] sm:$0xff] %v513
    %688 = vst [vmem:[#allocation7 + $0xe0] sm:$0xff] %v518
    %689 = vst [vmem:[#allocation7 + $0xe8] sm:$0xff] %v521
    %690 = vst [vmem:[#allocation7 + $0xf0] sm:$0xff] %v526
    %691 = vst [vmem:[#allocation7 + $0xf8] sm:$0xff] %v529
    %692 = vst [vmem:[#allocation7 + $0x100] sm:$0xff] %v534
    %693 = vst [vmem:[#allocation7 + $0x108] sm:$0xff] %v537
    %694 = vst [vmem:[#allocation7 + $0x110] sm:$0xff] %v542
    %695 = vst [vmem:[#allocation7 + $0x118] sm:$0xff] %v545
    %696 = vst [vmem:[#allocation7 + $0x120] sm:$0xff] %v550
    %697 = vst [vmem:[#allocation7 + $0x128] sm:$0xff] %v553
    %698 = vst [vmem:[#allocation7 + $0x130] sm:$0xff] %v558
    %699 = vst [vmem:[#allocation7 + $0x138] sm:$0xff] %v561
    %700 = vst [vmem:[#allocation7 + $0x140] sm:$0xff] %v566
    %701 = vst [vmem:[#allocation7 + $0x148] sm:$0xff] %v569
    %702 = vst [vmem:[#allocation7 + $0x150] sm:$0xff] %v574
    %703 = vst [vmem:[#allocation7 + $0x158] sm:$0xff] %v577
    %704 = vst [vmem:[#allocation7 + $0x160] sm:$0xff] %v582
    %705 = vst [vmem:[#allocation7 + $0x168] sm:$0xff] %v585
    %706 = vst [vmem:[#allocation7 + $0x170] sm:$0xff] %v590
    %707 = vst [vmem:[#allocation7 + $0x178] sm:$0xff] %v593
    %708 = vst [vmem:[#allocation7 + $0x180] sm:$0xff] %v598
    %709 = vst [vmem:[#allocation7 + $0x188] sm:$0xff] %v601
    %710 = vst [vmem:[#allocation7 + $0x190] sm:$0xff] %v606
    %711 = vst [vmem:[#allocation7 + $0x198] sm:$0xff] %v609
    %712 = vst [vmem:[#allocation7 + $0x1a0] sm:$0xff] %v614
    %713 = vst [vmem:[#allocation7 + $0x1a8] sm:$0xff] %v617
    %714 = vst [vmem:[#allocation7 + $0x1b0] sm:$0xff] %v622
    %715 = vst [vmem:[#allocation7 + $0x1b8] sm:$0xff] %v625
    %716 = vst [vmem:[#allocation7 + $0x1c0] sm:$0xff] %v630
    %717 = vst [vmem:[#allocation7 + $0x1c8] sm:$0xff] %v633
    %718 = vst [vmem:[#allocation7 + $0x1d0] sm:$0xff] %v638
    %719 = vst [vmem:[#allocation7 + $0x1d8] sm:$0xff] %v641
    %720 = vst [vmem:[#allocation7 + $0x1e0] sm:$0xff] %v646
    %721 = vst [vmem:[#allocation7 + $0x1e8] sm:$0xff] %v649
    %722 = vst [vmem:[#allocation7 + $0x1f0] sm:$0xff] %v654
    %723 = vst [vmem:[#allocation7 + $0x1f8] sm:$0xff] %v657
    // Predicated region
    $region22: #{tpu_custom_call.1} parent=1 // pred_check
      _
    $region23: #{tpu_custom_call.1} parent=1 // pred_check_branch
      %725 = sbr.rel (0) target = $region25
    $region24: #{tpu_custom_call.1} parent=1 // pred_region
      %s727 = ssub.s32 8192, 8192
      %728 = vsyncadd [#allocation4], %s727
      %s729 = sshll.u32 [#allocation7], 4
      %s730 = int_to_ptr.vmem [resolvable:$true] %s729
      %735 = dma.vmem_to_hbm [thread:$0]  %s730, 8192, %s3, [#allocation4], 128, 128, 8
    $region25: #{tpu_custom_call.1} parent=1 // pred_fallthru
      _
    // Predicated region
    $region26: #{tpu_custom_call.1} parent=1 // pred_check
      _
    $region27: #{tpu_custom_call.1} parent=1 // pred_check_branch
      %737 = sbr.rel (0) target = $region29
    $region28: #{tpu_custom_call.1} parent=1 // pred_region
      %738 = dma.done [#allocation4], 8192
    $region29: #{tpu_custom_call.1} parent=1 // pred_fallthru
      _
    %739 = vsyncpa [#allocation3], 1
    %740 = vsyncpa [#allocation6], 1
    %741 = vsyncpa [#allocation4], 1

</llo_original>
